<compile_context>
chip_gen: v7x
topology: tpu7x:2x2x1
jax: 0.10.0
libtpu: 0.0.40
codegen_flags: <defaults>
</compile_context>

<pallas_src>
import functools

import jax
import jax.numpy as jnp
from jax.experimental import pallas as pl
from jax.experimental.pallas import tpu as pltpu


def _round_up(a, m):
    return ((a + m - 1) // m) * m


_HALO = 128  # fixed lane halo on every input window; must cover 2*(K-1)


# ----------------------------------------------------------------------------- kernel
def _ffn_kernel(x_ref, m_ref, w1_ref, b1_ref, w2_ref, b2_ref, o_ref, *,
                kernel_size, pad_l, tile_l, activation):
    """One TILE_L-wide lane chunk of fused mask -> conv1 -> act -> mask -> conv2.

    x_ref : (Cin_pad, TILE_X) padded-input window (matmul dtype), TILE_X = TILE_L+HALO.
            Window column r == flat padded-input column (c*TILE_L - pad_l + r).
    m_ref : (1, TILE_X)       input-aligned 0/1 mask for the same window.
    w1_ref: (K, F_pad, Cin_pad) conv1 taps.   b1_ref: (F_pad, 1) f32.
    w2_ref: (K, Cout,  F_pad)   conv2 taps.   b2_ref: (Cout, 1) f32.
    o_ref : (Cout, TILE_L) f32  output columns [c*TILE_L, (c+1)*TILE_L).
    """
    K = kernel_size
    tile_h = tile_l + K - 1          # h is computed with a (K-1)-column halo
    cdt = x_ref.dtype                # matmul / streaming dtype (bf16 on perf path)

    # masked padded input; mask is exactly 0/1 so the low-precision mul is exact
    xm = x_ref[...] * m_ref[...]                               # (Cin_pad, TILE_X)

    # ---- conv_1: K accumulated small dots on static lane-shifted views ----
    h = jnp.dot(w1_ref[0], xm[:, 0:tile_h],
                preferred_element_type=jnp.float32)            # (F_pad, tile_h) f32
    for k in range(1, K):
        h = h + jnp.dot(w1_ref[k], xm[:, k:k + tile_h],
                        preferred_element_type=jnp.float32)
    h = h + b1_ref[...]

    # ---- activation (f32 on VPU/EUP; correct on all TPU generations) ----
    if activation == "gelu":
        h = h * jax.nn.sigmoid(1.702 * h)        # matches x * sigmoid(1.702 x)
    else:
        h = jnp.maximum(h, 0.0)
    # TODO(synk): dropout omitted (dropout_p=0.0 / eval mode -> identity).
    # TODO(synk): on v6e/v7x the activation + re-mask could run packed in bf16;
    # kept in f32 so the same kernel is also efficient/valid on v5e.

    # ---- re-mask with the output-aligned mask (= input mask shifted by pad_l)
    #      and drop to the matmul dtype before the conv2 tap views ----
    mo = m_ref[:, pad_l:pad_l + tile_h]                        # (1, tile_h)
    hm = (h * mo.astype(jnp.float32)).astype(cdt)              # (F_pad, tile_h)

    # ---- conv_2: K accumulated small dots; halo columns of hm carry the
    #      neighbouring-tile values / per-batch zero padding, so no lane masks ----
    y = jnp.dot(w2_ref[0], hm[:, 0:tile_l],
                preferred_element_type=jnp.float32)            # (Cout, TILE_L) f32
    for k in range(1, K):
        y = y + jnp.dot(w2_ref[k], hm[:, k:k + tile_l],
                        preferred_element_type=jnp.float32)
    o_ref[...] = (y + b2_ref[...]).astype(o_ref.dtype)


# ----------------------------------------------------------------------------- wrapper
def ffn_pallas(x_nct, mask_n1t, w1, b1, w2, b2, *, kernel_size,
               activation="relu", causal=False, matmul_dtype=jnp.bfloat16,
               tile_l=8192):
    """x_nct: (B, Cin, T) f32 (PyTorch NCL).  mask_n1t: (B, 1, T) 0/1.
    w1: (F, Cin, K), b1: (F,), w2: (Cout, F, K), b2: (Cout,).  Returns (B, Cout, T)."""
    B, Cin, T = x_nct.shape
    Fc = w1.shape[0]
    Cout = w2.shape[0]
    K = kernel_size
    if K == 1:
        pad_l, pad_r = 0, 0
    elif causal:
        pad_l, pad_r = K - 1, 0
    else:
        pad_l, pad_r = (K - 1) // 2, K // 2
    assert 2 * (K - 1) <= _HALO, "kernel_size too large for the fixed 128-lane halo"

    Tp = T + pad_l + pad_r                     # per-batch padded stride
    BTp = B * Tp
    f32 = jnp.float32

    Cin_pad = _round_up(Cin, 8)                # sublane-aligned dot operands
    F_pad = _round_up(Fc, 8)

    TILE_L = min(_round_up(BTp, 128), _round_up(tile_l, 128))
    num_tiles = pl.cdiv(BTp, TILE_L)
    L = num_tiles * TILE_L                     # lane-dense flat output width
    TILE_X = TILE_L + _HALO                    # input/mask window width
    W = L + _HALO                              # shifted flat-input width

    # ---- layout plumbing (XLA glue) ----
    # (B, Cin, T) -> (Cin_pad, B, Tp) -> flat (Cin_pad, BTp); shift left edge by
    # pad_l so window c starts at flat padded-input column c*TILE_L - pad_l.
    xp = jnp.transpose(x_nct, (1, 0, 2)).astype(f32)
    xp = jnp.pad(xp, ((0, Cin_pad - Cin), (0, 0), (pad_l, pad_r)))
    xs = jnp.pad(xp.reshape(Cin_pad, BTp),
                 ((0, 0), (pad_l, W - pad_l - BTp))).astype(matmul_dtype)

    m = mask_n1t.reshape(B, T).astype(f32)
    ms = jnp.pad(jnp.pad(m, ((0, 0), (pad_l, pad_r))).reshape(1, BTp),
                 ((0, 0), (pad_l, W - pad_l - BTp))).astype(matmul_dtype)

    # Overlapping per-tile windows (stride TILE_L, width TILE_X) built once in
    # HBM: costs HALO/TILE_L extra input bytes but keeps every in-kernel view a
    # static slice (no dynamic lane indexing, no cross-tile wrap issues).
    xw = jnp.stack([xs[:, c * TILE_L:c * TILE_L + TILE_X] for c in range(num_tiles)])
    mw = jnp.stack([ms[:, c * TILE_L:c * TILE_L + TILE_X] for c in range(num_tiles)])

    # conv taps: (O, I, K) -> (K, O_pad, I_pad), zero-padded channels
    w1r = jnp.transpose(jnp.pad(w1, ((0, F_pad - Fc), (0, Cin_pad - Cin), (0, 0))),
                        (2, 0, 1)).astype(matmul_dtype)
    w2r = jnp.transpose(jnp.pad(w2, ((0, 0), (0, F_pad - Fc), (0, 0))),
                        (2, 0, 1)).astype(matmul_dtype)
    b1r = jnp.pad(b1, (0, F_pad - Fc)).reshape(F_pad, 1).astype(f32)
    b2r = b2.reshape(Cout, 1).astype(f32)

    # ---- per-step VMEM budget (documented tile math -> vmem_limit_bytes) ----
    it = jnp.dtype(matmul_dtype).itemsize
    tile_h = TILE_L + K - 1
    bytes_per_step = (
        2 * Cin_pad * TILE_X * it                    # x window (double-buffered)
        + 2 * 1 * TILE_X * it                        # mask window (double-buffered)
        + 2 * Cout * TILE_L * 4                      # output block (double-buffered)
        + 2 * (K * F_pad * (Cin_pad + Cout) * it + (F_pad + Cout) * 4)  # weights/bias
        + F_pad * tile_h * 4                         # h (f32)
        + (K + 1) * F_pad * tile_h * it              # hm + conv2 tap views
        + (K + 1) * Cin_pad * TILE_X * it)           # x*mask + conv1 tap views
    vmem_limit = int(min(max(2 * bytes_per_step, 32 * 1024 * 1024),
                         48 * 1024 * 1024))

    kern = functools.partial(_ffn_kernel, kernel_size=K, pad_l=pad_l,
                             tile_l=TILE_L, activation=activation)

    inputs = (xw, mw, w1r, b1r, w2r, b2r)
    bytes_accessed = sum(int(a.size) * a.dtype.itemsize for a in inputs) + Cout * L * 4
    cost = pl.CostEstimate(
        flops=2 * B * T * K * (Cin * Fc + Fc * Cout),
        transcendentals=(B * T * Fc) if activation == "gelu" else 0,
        bytes_accessed=int(bytes_accessed))

    out_flat = pl.pallas_call(
        kern,
        out_shape=jax.ShapeDtypeStruct((Cout, L), f32),
        grid_spec=pltpu.PrefetchScalarGridSpec(
            num_scalar_prefetch=0,
            grid=(num_tiles,),
            in_specs=[
                pl.BlockSpec((None, Cin_pad, TILE_X), lambda c: (c, 0, 0)),  # x window
                pl.BlockSpec((None, 1, TILE_X), lambda c: (c, 0, 0)),        # mask window
                # weights / biases: constant block index -> resident across steps.
                # TODO(synk): pipeline_mode=pl.Buffered(1) would drop their second
                # buffer; omitted since they total only a few KiB.
                pl.BlockSpec((K, F_pad, Cin_pad), lambda c: (0, 0, 0)),
                pl.BlockSpec((F_pad, 1), lambda c: (0, 0)),
                pl.BlockSpec((K, Cout, F_pad), lambda c: (0, 0, 0)),
                pl.BlockSpec((Cout, 1), lambda c: (0, 0)),
            ],
            out_specs=pl.BlockSpec((Cout, TILE_L), lambda c: (0, c)),
        ),
        compiler_params=pltpu.CompilerParams(
            dimension_semantics=("parallel",),     # lane chunks are independent
            vmem_limit_bytes=vmem_limit),
        cost_estimate=cost,
    )(*inputs)

    # unflatten: (Cout, L) -> (Cout, B, Tp) -> (B, Cout, T)
    out = out_flat[:, :BTp].reshape(Cout, B, Tp)[:, :, :T]
    return jnp.transpose(out, (1, 0, 2))


# ----------------------------------------------------------------------------- reference
def ffn_ref(x, mask, w1, b1, w2, b2, *, kernel_size, activation, causal):
    K = kernel_size
    if K == 1:
        pad = (0, 0)
    elif causal:
        pad = (K - 1, 0)
    else:
        pad = ((K - 1) // 2, K // 2)

    def conv1d(x, w, b):
        xp = jnp.pad(x, ((0, 0), (0, 0), (pad[0], pad[1])))
        y = jax.lax.conv_general_dilated(
            xp, w, window_strides=(1,), padding="VALID",
            dimension_numbers=("NCH", "OIH", "NCH"))
        return y + b[None, :, None]

    x = x * mask
    h = conv1d(x, w1, b1)
    if activation == "gelu":
        h = h * jax.nn.sigmoid(1.702 * h)
    else:
        h = jnp.maximum(h, 0.0)
    h = h * mask
    return conv1d(h, w2, b2)


# ----------------------------------------------------------------------------- main
if __name__ == "__main__":
    in_channels, out_channels, filter_channels = 4, 4, 32
    kernel_size = 3
    activation = "gelu"
    B, T = 2, 16

    key = jax.random.PRNGKey(0)
    kx, kw1, kb1, kw2, kb2, kx2 = jax.random.split(key, 6)

    x = jax.random.normal(kx, (B, in_channels, T), dtype=jnp.float32)
    lens = jnp.array([16, 12])
    mask = (jnp.arange(T)[None, None, :] < lens[:, None, None]).astype(jnp.float32)

    w1 = jax.random.normal(kw1, (filter_channels, in_channels, kernel_size),
                           dtype=jnp.float32) * 0.2
    b1 = jax.random.normal(kb1, (filter_channels,), dtype=jnp.float32) * 0.1
    w2 = jax.random.normal(kw2, (out_channels, filter_channels, kernel_size),
                           dtype=jnp.float32) * 0.2
    b2 = jax.random.normal(kb2, (out_channels,), dtype=jnp.float32) * 0.1

    ref = ffn_ref(x, mask, w1, b1, w2, b2, kernel_size=kernel_size,
                  activation=activation, causal=False)

    # 1) exact-path check (f32 operands): validates halo / shift / mask geometry.
    out_f32 = ffn_pallas(x, mask, w1, b1, w2, b2, kernel_size=kernel_size,
                         activation=activation, causal=False,
                         matmul_dtype=jnp.float32)
    out_f32 = jax.block_until_ready(out_f32)
    assert out_f32.shape == (B, out_channels, T), out_f32.shape
    assert jnp.allclose(out_f32, ref, atol=1e-3, rtol=1e-3), \
        float(jnp.abs(out_f32 - ref).max())

    # 2) performance path (bf16 operands + bf16 intermediates, f32 accumulation).
    out = ffn_pallas(x, mask, w1, b1, w2, b2, kernel_size=kernel_size,
                     activation=activation, causal=False,
                     matmul_dtype=jnp.bfloat16)
    out = jax.block_until_ready(out)
    assert out.shape == (B, out_channels, T), out.shape
    assert jnp.allclose(out, ref, atol=5e-2, rtol=5e-2), \
        float(jnp.abs(out - ref).max())

    # 3) causal-padding path (f32 exact).
    ref_c = ffn_ref(x, mask, w1, b1, w2, b2, kernel_size=kernel_size,
                    activation=activation, causal=True)
    out_c = jax.block_until_ready(
        ffn_pallas(x, mask, w1, b1, w2, b2, kernel_size=kernel_size,
                   activation=activation, causal=True, matmul_dtype=jnp.float32))
    assert jnp.allclose(out_c, ref_c, atol=1e-3, rtol=1e-3), \
        float(jnp.abs(out_c - ref_c).max())

    # 4) kernel_size=1 path (f32 exact).
    w1_k1, w2_k1 = w1[:, :, :1], w2[:, :, :1]
    ref_1 = ffn_ref(x, mask, w1_k1, b1, w2_k1, b2, kernel_size=1,
                    activation="relu", causal=False)
    out_1 = jax.block_until_ready(
        ffn_pallas(x, mask, w1_k1, b1, w2_k1, b2, kernel_size=1,
                   activation="relu", causal=False, matmul_dtype=jnp.float32))
    assert jnp.allclose(out_1, ref_1, atol=1e-3, rtol=1e-3), \
        float(jnp.abs(out_1 - ref_1).max())

    # 5) multi-tile path (forces num_tiles > 1 with a small tile override; f32 exact).
    T2 = 200
    x2 = jax.random.normal(kx2, (B, in_channels, T2), dtype=jnp.float32)
    lens2 = jnp.array([200, 150])
    mask2 = (jnp.arange(T2)[None, None, :] < lens2[:, None, None]).astype(jnp.float32)
    ref_mt = ffn_ref(x2, mask2, w1, b1, w2, b2, kernel_size=kernel_size,
                     activation=activation, causal=False)
    out_mt = jax.block_until_ready(
        ffn_pallas(x2, mask2, w1, b1, w2, b2, kernel_size=kernel_size,
                   activation=activation, causal=False,
                   matmul_dtype=jnp.float32, tile_l=128))
    assert jnp.allclose(out_mt, ref_mt, atol=1e-3, rtol=1e-3), \
        float(jnp.abs(out_mt - ref_mt).max())

    print("KERNEL_OK")
</pallas_src>

<mosaic_0001>
module attributes {stable_mosaic.version = 11 : i64} {
  func.func @_ffn_kernel(%arg0: i32, %arg1: memref<1x8x256xf32, #tpu.memory_space<vmem>>, %arg2: memref<1x1x256xf32, #tpu.memory_space<vmem>>, %arg3: memref<3x32x8xf32, #tpu.memory_space<vmem>>, %arg4: memref<32x1xf32, #tpu.memory_space<vmem>>, %arg5: memref<3x4x32xf32, #tpu.memory_space<vmem>>, %arg6: memref<4x1xf32, #tpu.memory_space<vmem>>, %arg7: memref<4x128xf32, #tpu.memory_space<vmem>>) attributes {dimension_semantics = [#tpu.dimension_semantics<parallel>], iteration_bounds = array<i64: 1>, scalar_prefetch = 0 : i64, scratch_operands = 0 : i64, tpu.core_type = #tpu.core_type<tc>, window_params = [{transform_indices = @transform_0, window_bounds = array<i64: 1, 8, 256>}, {transform_indices = @transform_1, window_bounds = array<i64: 1, 1, 256>}, {pipeline_mode = #tpu.pipeline_mode<synchronous>, transform_indices = @transform_2, window_bounds = array<i64: 3, 32, 8>}, {pipeline_mode = #tpu.pipeline_mode<synchronous>, transform_indices = @transform_3, window_bounds = array<i64: 32, 1>}, {pipeline_mode = #tpu.pipeline_mode<synchronous>, transform_indices = @transform_4, window_bounds = array<i64: 3, 4, 32>}, {pipeline_mode = #tpu.pipeline_mode<synchronous>, transform_indices = @transform_5, window_bounds = array<i64: 4, 1>}, {transform_indices = @transform_6, window_bounds = array<i64: 4, 128>}]} {
    %c0 = arith.constant 0 : index
    %c0_0 = arith.constant 0 : index
    %c0_1 = arith.constant 0 : index
    %0 = vector.load %arg1[%c0, %c0_0, %c0_1] : memref<1x8x256xf32, #tpu.memory_space<vmem>>, vector<1x8x256xf32>
    %1 = vector.shape_cast %0 : vector<1x8x256xf32> to vector<8x256xf32>
    %c0_2 = arith.constant 0 : index
    %c0_3 = arith.constant 0 : index
    %c0_4 = arith.constant 0 : index
    %2 = vector.load %arg2[%c0_2, %c0_3, %c0_4] : memref<1x1x256xf32, #tpu.memory_space<vmem>>, vector<1x1x256xf32>
    %3 = vector.shape_cast %2 : vector<1x1x256xf32> to vector<1x256xf32>
    %4 = vector.broadcast %3 : vector<1x256xf32> to vector<8x256xf32>
    %5 = arith.mulf %1, %4 : vector<8x256xf32>
    %c0_5 = arith.constant 0 : index
    %c0_6 = arith.constant 0 : index
    %c0_7 = arith.constant 0 : index
    %6 = vector.load %arg3[%c0_5, %c0_6, %c0_7] : memref<3x32x8xf32, #tpu.memory_space<vmem>>, vector<1x32x8xf32>
    %7 = vector.shape_cast %6 : vector<1x32x8xf32> to vector<32x8xf32>
    %8 = vector.extract_strided_slice %5 {offsets = [0, 0], sizes = [8, 130], strides = [1, 1]} : vector<8x256xf32> to vector<8x130xf32>
    %cst = arith.constant dense<0.000000e+00> : vector<32x130xf32>
    %9 = tpu.matmul %7, %8, %cst {dimension_numbers = #tpu.dot_dimension_numbers<[1], [0], [0], [1], [0, 0, 1, 1], [], []>} : vector<32x8xf32>, vector<8x130xf32>, vector<32x130xf32> -> vector<32x130xf32>
    %c1 = arith.constant 1 : index
    %c0_8 = arith.constant 0 : index
    %c0_9 = arith.constant 0 : index
    %10 = vector.load %arg3[%c1, %c0_8, %c0_9] : memref<3x32x8xf32, #tpu.memory_space<vmem>>, vector<1x32x8xf32>
    %11 = vector.shape_cast %10 : vector<1x32x8xf32> to vector<32x8xf32>
    %12 = vector.extract_strided_slice %5 {offsets = [0, 1], sizes = [8, 130], strides = [1, 1]} : vector<8x256xf32> to vector<8x130xf32>
    %cst_10 = arith.constant dense<0.000000e+00> : vector<32x130xf32>
    %13 = tpu.matmul %11, %12, %cst_10 {dimension_numbers = #tpu.dot_dimension_numbers<[1], [0], [0], [1], [0, 0, 1, 1], [], []>} : vector<32x8xf32>, vector<8x130xf32>, vector<32x130xf32> -> vector<32x130xf32>
    %14 = arith.addf %9, %13 : vector<32x130xf32>
    %c2 = arith.constant 2 : index
    %c0_11 = arith.constant 0 : index
    %c0_12 = arith.constant 0 : index
    %15 = vector.load %arg3[%c2, %c0_11, %c0_12] : memref<3x32x8xf32, #tpu.memory_space<vmem>>, vector<1x32x8xf32>
    %16 = vector.shape_cast %15 : vector<1x32x8xf32> to vector<32x8xf32>
    %17 = vector.extract_strided_slice %5 {offsets = [0, 2], sizes = [8, 130], strides = [1, 1]} : vector<8x256xf32> to vector<8x130xf32>
    %cst_13 = arith.constant dense<0.000000e+00> : vector<32x130xf32>
    %18 = tpu.matmul %16, %17, %cst_13 {dimension_numbers = #tpu.dot_dimension_numbers<[1], [0], [0], [1], [0, 0, 1, 1], [], []>} : vector<32x8xf32>, vector<8x130xf32>, vector<32x130xf32> -> vector<32x130xf32>
    %19 = arith.addf %14, %18 : vector<32x130xf32>
    %c0_14 = arith.constant 0 : index
    %c0_15 = arith.constant 0 : index
    %20 = vector.load %arg4[%c0_14, %c0_15] : memref<32x1xf32, #tpu.memory_space<vmem>>, vector<32x1xf32>
    %21 = vector.broadcast %20 : vector<32x1xf32> to vector<32x130xf32>
    %22 = arith.addf %19, %21 : vector<32x130xf32>
    %cst_16 = arith.constant 1.702000e+00 : f32
    %23 = vector.broadcast %cst_16 : f32 to vector<32x130xf32>
    %24 = arith.mulf %23, %22 : vector<32x130xf32>
    %25 = arith.negf %24 : vector<32x130xf32>
    %26 = math.exp %25 : vector<32x130xf32>
    %cst_17 = arith.constant 1.000000e+00 : f32
    %27 = vector.broadcast %cst_17 : f32 to vector<32x130xf32>
    %28 = arith.addf %27, %26 : vector<32x130xf32>
    %29 = arith.divf %27, %28 : vector<32x130xf32>
    %30 = arith.mulf %22, %29 : vector<32x130xf32>
    %c0_18 = arith.constant 0 : index
    %c0_19 = arith.constant 0 : index
    %c1_20 = arith.constant 1 : index
    %31 = vector.load %arg2[%c0_18, %c0_19, %c1_20] : memref<1x1x256xf32, #tpu.memory_space<vmem>>, vector<1x1x130xf32>
    %32 = vector.shape_cast %31 : vector<1x1x130xf32> to vector<1x130xf32>
    %33 = vector.broadcast %32 : vector<1x130xf32> to vector<32x130xf32>
    %34 = arith.mulf %30, %33 : vector<32x130xf32>
    %c0_21 = arith.constant 0 : index
    %c0_22 = arith.constant 0 : index
    %c0_23 = arith.constant 0 : index
    %35 = vector.load %arg5[%c0_21, %c0_22, %c0_23] : memref<3x4x32xf32, #tpu.memory_space<vmem>>, vector<1x4x32xf32>
    %36 = vector.shape_cast %35 : vector<1x4x32xf32> to vector<4x32xf32>
    %37 = vector.extract_strided_slice %34 {offsets = [0, 0], sizes = [32, 128], strides = [1, 1]} : vector<32x130xf32> to vector<32x128xf32>
    %cst_24 = arith.constant dense<0.000000e+00> : vector<4x128xf32>
    %38 = tpu.matmul %36, %37, %cst_24 {dimension_numbers = #tpu.dot_dimension_numbers<[1], [0], [0], [1], [0, 0, 1, 1], [], []>} : vector<4x32xf32>, vector<32x128xf32>, vector<4x128xf32> -> vector<4x128xf32>
    %c1_25 = arith.constant 1 : index
    %c0_26 = arith.constant 0 : index
    %c0_27 = arith.constant 0 : index
    %39 = vector.load %arg5[%c1_25, %c0_26, %c0_27] : memref<3x4x32xf32, #tpu.memory_space<vmem>>, vector<1x4x32xf32>
    %40 = vector.shape_cast %39 : vector<1x4x32xf32> to vector<4x32xf32>
    %41 = vector.extract_strided_slice %34 {offsets = [0, 1], sizes = [32, 128], strides = [1, 1]} : vector<32x130xf32> to vector<32x128xf32>
    %cst_28 = arith.constant dense<0.000000e+00> : vector<4x128xf32>
    %42 = tpu.matmul %40, %41, %cst_28 {dimension_numbers = #tpu.dot_dimension_numbers<[1], [0], [0], [1], [0, 0, 1, 1], [], []>} : vector<4x32xf32>, vector<32x128xf32>, vector<4x128xf32> -> vector<4x128xf32>
    %43 = arith.addf %38, %42 : vector<4x128xf32>
    %c2_29 = arith.constant 2 : index
    %c0_30 = arith.constant 0 : index
    %c0_31 = arith.constant 0 : index
    %44 = vector.load %arg5[%c2_29, %c0_30, %c0_31] : memref<3x4x32xf32, #tpu.memory_space<vmem>>, vector<1x4x32xf32>
    %45 = vector.shape_cast %44 : vector<1x4x32xf32> to vector<4x32xf32>
    %46 = vector.extract_strided_slice %34 {offsets = [0, 2], sizes = [32, 128], strides = [1, 1]} : vector<32x130xf32> to vector<32x128xf32>
    %cst_32 = arith.constant dense<0.000000e+00> : vector<4x128xf32>
    %47 = tpu.matmul %45, %46, %cst_32 {dimension_numbers = #tpu.dot_dimension_numbers<[1], [0], [0], [1], [0, 0, 1, 1], [], []>} : vector<4x32xf32>, vector<32x128xf32>, vector<4x128xf32> -> vector<4x128xf32>
    %48 = arith.addf %43, %47 : vector<4x128xf32>
    %c0_33 = arith.constant 0 : index
    %c0_34 = arith.constant 0 : index
    %49 = vector.load %arg6[%c0_33, %c0_34] : memref<4x1xf32, #tpu.memory_space<vmem>>, vector<4x1xf32>
    %50 = vector.broadcast %49 : vector<4x1xf32> to vector<4x128xf32>
    %51 = arith.addf %48, %50 : vector<4x128xf32>
    %c0_35 = arith.constant 0 : index
    %c0_36 = arith.constant 0 : index
    %52 = vector.load %arg7[%c0_35, %c0_36] : memref<4x128xf32, #tpu.memory_space<vmem>>, vector<4x128xf32>
    tpu.vector_store %arg7[%c0_35, %c0_36], %51 {strides = array<i32>} : memref<4x128xf32, #tpu.memory_space<vmem>>, vector<4x128xf32>,
    return
  }
  func.func @transform_0(%arg0: i32) -> (i32, i32, i32) {
    %c0_i32 = arith.constant 0 : i32
    %c0_i32_0 = arith.constant 0 : i32
    %c0_i32_1 = arith.constant 0 : i32
    return %arg0, %c0_i32, %c0_i32_0 : i32, i32, i32
  }
  func.func @transform_1(%arg0: i32) -> (i32, i32, i32) {
    %c0_i32 = arith.constant 0 : i32
    %c0_i32_0 = arith.constant 0 : i32
    %c0_i32_1 = arith.constant 0 : i32
    return %arg0, %c0_i32, %c0_i32_0 : i32, i32, i32
  }
  func.func @transform_2(%arg0: i32) -> (i32, i32, i32) {
    %c0_i32 = arith.constant 0 : i32
    %c0_i32_0 = arith.constant 0 : i32
    %c0_i32_1 = arith.constant 0 : i32
    %c0_i32_2 = arith.constant 0 : i32
    return %c0_i32, %c0_i32_0, %c0_i32_1 : i32, i32, i32
  }
  func.func @transform_3(%arg0: i32) -> (i32, i32) {
    %c0_i32 = arith.constant 0 : i32
    %c0_i32_0 = arith.constant 0 : i32
    %c0_i32_1 = arith.constant 0 : i32
    return %c0_i32, %c0_i32_0 : i32, i32
  }
  func.func @transform_4(%arg0: i32) -> (i32, i32, i32) {
    %c0_i32 = arith.constant 0 : i32
    %c0_i32_0 = arith.constant 0 : i32
    %c0_i32_1 = arith.constant 0 : i32
    %c0_i32_2 = arith.constant 0 : i32
    return %c0_i32, %c0_i32_0, %c0_i32_1 : i32, i32, i32
  }
  func.func @transform_5(%arg0: i32) -> (i32, i32) {
    %c0_i32 = arith.constant 0 : i32
    %c0_i32_0 = arith.constant 0 : i32
    %c0_i32_1 = arith.constant 0 : i32
    return %c0_i32, %c0_i32_0 : i32, i32
  }
  func.func @transform_6(%arg0: i32) -> (i32, i32) {
    %c0_i32 = arith.constant 0 : i32
    %c0_i32_0 = arith.constant 0 : i32
    return %c0_i32, %arg0 : i32, i32
  }
}

</mosaic_0001>

<llo_original>
// kernel: tpu_custom_call.1
$region0: #{tpu_custom_call.1}
  #allocation0 [shape = 'u32[]', space=smem, size = 0x4, offset = 0x4, fixed_abs, tag = 'smem constant byte address 0x4 - core index']
  #allocation1 [shape = 'u32[144,128]{1,0:T(1,128)}', space=vmem, size = 0x12000, scoped, tag = 'internal scratch']
  %s0 = inlined_call_operand.vmem [shape: f32[1,8,256], index: 0, kind: input, shape index: {}]
  %s1 = inlined_call_operand.vmem [shape: f32[1,1,256], index: 1, kind: input, shape index: {}]
  %s2 = inlined_call_operand.vmem [shape: f32[3,32,8], index: 2, kind: input, shape index: {}]
  %s3 = inlined_call_operand.vmem [shape: f32[32,1], index: 3, kind: input, shape index: {}]
  %s4 = inlined_call_operand.vmem [shape: f32[3,4,32], index: 4, kind: input, shape index: {}]
  %s5 = inlined_call_operand.vmem [shape: f32[4,1], index: 5, kind: input, shape index: {}]
  %s6 = inlined_call_operand.hbm [shape: f32[4,128], index: 6, kind: output, shape index: {}]
  %s7 = sld [smem:[#allocation0]]
  $region34: #{tpu_custom_call.1} parent=0
    _
  %s9 = ssub.s32 1, %s7
  %s10 = scalar_select 0, %s9, %s7
  $region1: #{tpu_custom_call.1} parent=0
    #allocation2 [shape = 'u8[2048]{0}', space=vmem, size = 0x800, scoped, tag = 'output window, operand 0, single buffered']
    #allocation3 [shape = 's32[1]{0}', space=sflag, size = 0x4, scoped, tag = 'scoped memory for tpu_custom_call.1']
    %11 = vsyncpa [#allocation3], 0
    // Predicated region
    $region2: #{tpu_custom_call.1} parent=1 // pred_check
      _
    $region3: #{tpu_custom_call.1} parent=1 // pred_check_branch
      %13 = sbr.rel (0) target = $region5
    $region4: #{tpu_custom_call.1} parent=1 // pred_region
      _
    $region5: #{tpu_custom_call.1} parent=1 // pred_fallthru
      _
    // Predicated region
    $region6: #{tpu_custom_call.1} parent=1 // pred_check
      _
    $region7: #{tpu_custom_call.1} parent=1 // pred_check_branch
      %15 = sbr.rel (0) target = $region9
    $region8: #{tpu_custom_call.1} parent=1 // pred_region
      _
    $region9: #{tpu_custom_call.1} parent=1 // pred_fallthru
      _
    // Predicated region
    $region10: #{tpu_custom_call.1} parent=1 // pred_check
      _
    $region11: #{tpu_custom_call.1} parent=1 // pred_check_branch
      %17 = sbr.rel (0) target = $region13
    $region12: #{tpu_custom_call.1} parent=1 // pred_region
      _
    $region13: #{tpu_custom_call.1} parent=1 // pred_fallthru
      _
    // Predicated region
    $region14: #{tpu_custom_call.1} parent=1 // pred_check
      _
    $region15: #{tpu_custom_call.1} parent=1 // pred_check_branch
      %19 = sbr.rel (0) target = $region17
    $region16: #{tpu_custom_call.1} parent=1 // pred_region
      _
    $region17: #{tpu_custom_call.1} parent=1 // pred_fallthru
      _
    // Predicated region
    $region18: #{tpu_custom_call.1} parent=1 // pred_check
      _
    $region19: #{tpu_custom_call.1} parent=1 // pred_check_branch
      %21 = sbr.rel (0) target = $region21
    $region20: #{tpu_custom_call.1} parent=1 // pred_region
      _
    $region21: #{tpu_custom_call.1} parent=1 // pred_fallthru
      _
    // Predicated region
    $region22: #{tpu_custom_call.1} parent=1 // pred_check
      _
    $region23: #{tpu_custom_call.1} parent=1 // pred_check_branch
      %23 = sbr.rel (0) target = $region25
    $region24: #{tpu_custom_call.1} parent=1 // pred_region
      _
    $region25: #{tpu_custom_call.1} parent=1 // pred_fallthru
      _
    %v24 = vld [vmem:[%s0] sm:$0xff]
    %v25 = vld [vmem:[%s0 + $0x8] sm:$0xff]
    %v26 = vld [vmem:[%s1] sm:$0x3]
    %v28 = vlaneseq
    %v29 = vshrl.u32 %v28, 7
    %v30 = vsub.s32 0, %v29
    %v31 = vrot.slane %v26, %v30
    %v32 = vlaneseq
    %v33 = vshrl.u32 %v32, 7
    %v34 = vsub.s32 1, %v33
    %v35 = vrot.slane %v26, %v34
    %v38 = vmul.f32 %v24, %v31
    %v39 = vmul.f32 %v25, %v35
    %v40 = vld [vmem:[%s2] sm:$0xff]
    %v41 = vld [vmem:[%s2 + $0x8] sm:$0xff]
    %v42 = vld [vmem:[%s2 + $0x10] sm:$0xff]
    %v43 = vld [vmem:[%s2 + $0x18] sm:$0xff]
    %s44 = scalar_lea.vmem %s2, 32
    %v45 = vld [vmem:[%s44] sm:$0xff]
    %v46 = vld [vmem:[%s44 + $0x8] sm:$0xff]
    %v47 = vld [vmem:[%s44 + $0x10] sm:$0xff]
    %v48 = vld [vmem:[%s44 + $0x18] sm:$0xff]
    %51 = vrot.lane.b32.xlu0 %v38, 127
    %v52 = vpop.permute.xlu0 %51
    %53 = vrot.lane.b32.xlu0 %v39, 127
    %v54 = vpop.permute.xlu0 %53
    %vm55 = vcmask 1039360
    %v56 = vsel %vm55, %v52, %v54
    %vm59 = vcmask 64512
    %v61 = vsel %vm59, %v45, 0
    %v64 = vsel %vm59, %v46, 0
    %v67 = vsel %vm59, %v47, 0
    %v70 = vsel %vm59, %v48, 0
    %72 = vmatprep.subr.mxu0 %v54
    %73 = vmatpush1.msra.mxu0 %v56
    %74 = vmatprep.subr.mxu0 0.0
    %75 = vmatpush1.msra.mxu0 0.0
    %76 = vmatprep.subr.mxu0 0.0
    %77 = vmatpush1.msra.mxu0 0.0
    %78 = vmatprep.subr.mxu0 0.0
    %79 = vmatpush1.msra.mxu0 0.0
    %80 = vmatprep.subr.mxu0 0.0
    %81 = vmatpush1.msra.mxu0 0.0
    %82 = vmatprep.subr.mxu0 0.0
    %83 = vmatpush1.msra.mxu0 0.0
    %84 = vmatprep.subr.mxu0 0.0
    %85 = vmatpush1.msra.mxu0 0.0
    %86 = vmatprep.subr.mxu0 0.0
    %87 = vmatpush1.msra.mxu0 0.0
    %88 = vmatprep.subr.mxu0 0.0
    %89 = vmatpush1.msra.mxu0 0.0
    %90 = vmatprep.subr.mxu0 0.0
    %91 = vmatpush1.msra.mxu0 0.0
    %92 = vmatprep.subr.mxu0 0.0
    %93 = vmatpush1.msra.mxu0 0.0
    %94 = vmatprep.subr.mxu0 0.0
    %95 = vmatpush1.msra.mxu0 0.0
    %96 = vmatprep.subr.mxu0 0.0
    %97 = vmatpush1.msra.mxu0 0.0
    %98 = vmatprep.subr.mxu0 0.0
    %99 = vmatpush1.msra.mxu0 0.0
    %100 = vmatprep.subr.mxu0 0.0
    %101 = vmatpush1.msra.mxu0 0.0
    %102 = vmatprep.subr.mxu0 0.0
    %103 = vmatpush1.msra.mxu0 0.0
    %104 = vmatprep.subr.mxu0 0.0
    %105 = vmatpush1.msra.mxu0 0.0
    %106 = vmatprep.subr.mxu0 0.0
    %107 = vmatpush1.msra.mxu0 0.0
    %108 = vmatprep.subr.mxu0 0.0
    %109 = vmatpush1.msra.mxu0 0.0
    %110 = vmatprep.subr.mxu0 0.0
    %111 = vmatpush1.msra.mxu0 0.0
    %112 = vmatprep.subr.mxu0 0.0
    %113 = vmatpush1.msra.mxu0 0.0
    %114 = vmatprep.subr.mxu0 0.0
    %115 = vmatpush1.msra.mxu0 0.0
    %116 = vmatprep.subr.mxu0 0.0
    %117 = vmatpush1.msra.mxu0 0.0
    %118 = vmatprep.subr.mxu0 0.0
    %119 = vmatpush1.msra.mxu0 0.0
    %120 = vmatprep.subr.mxu0 0.0
    %121 = vmatpush1.msra.mxu0 0.0
    %122 = vmatprep.subr.mxu0 0.0
    %123 = vmatpush1.msra.mxu0 0.0
    %124 = vmatprep.subr.mxu0 0.0
    %125 = vmatpush1.msra.mxu0 0.0
    %126 = vmatprep.subr.mxu0 0.0
    %127 = vmatpush1.msra.mxu0 0.0
    %128 = vmatprep.subr.mxu0 0.0
    %129 = vmatpush1.msra.mxu0 0.0
    %130 = vmatprep.subr.mxu0 0.0
    %131 = vmatpush1.msra.mxu0 0.0
    %132 = vmatprep.subr.mxu0 0.0
    %133 = vmatpush1.msra.mxu0 0.0
    %134 = vmatprep.subr.mxu0 0.0
    %135 = vmatpush1.msra.mxu0 0.0
    %136 = vmatprep.mubr.f32.mxu0 0.0
    %137 = vmatmul.mubr.f32.gmra.mrb[0].mxu0 %v61
    %v138 = vpop.f32.mrb[0].mxu0
    %v139 = vadd.f32 0.0, %v138
    %v140 = vpop.f32.mrb[0].mxu0
    %v141 = vadd.f32 0.0, %v140
    %142 = vmatprep.mubr.f32.mxu0 0.0
    %143 = vmatmul.mubr.f32.gmra.mrb[0].mxu0 %v64
    %v144 = vpop.f32.mrb[0].mxu0
    %v145 = vadd.f32 0.0, %v144
    %v146 = vpop.f32.mrb[0].mxu0
    %v147 = vadd.f32 0.0, %v146
    %148 = vmatprep.mubr.f32.mxu0 0.0
    %149 = vmatmul.mubr.f32.gmra.mrb[0].mxu0 %v67
    %v150 = vpop.f32.mrb[0].mxu0
    %v151 = vadd.f32 0.0, %v150
    %v152 = vpop.f32.mrb[0].mxu0
    %v153 = vadd.f32 0.0, %v152
    %154 = vmatprep.mubr.f32.mxu0 0.0
    %155 = vmatmul.mubr.f32.gmra.mrb[0].mxu0 %v70
    %v156 = vpop.f32.mrb[0].mxu0
    %v157 = vadd.f32 0.0, %v156
    %v158 = vpop.f32.mrb[0].mxu0
    %v159 = vadd.f32 0.0, %v158
    %160 = vdwg.mxu0
    %v162 = vsel %vm59, %v40, 0
    %v165 = vsel %vm59, %v41, 0
    %v168 = vsel %vm59, %v42, 0
    %v171 = vsel %vm59, %v43, 0
    %173 = vmatprep.subr.mxu0 %v39
    %174 = vmatpush1.msra.mxu0 %v38
    %175 = vmatprep.subr.mxu0 0.0
    %176 = vmatpush1.msra.mxu0 0.0
    %177 = vmatprep.subr.mxu0 0.0
    %178 = vmatpush1.msra.mxu0 0.0
    %179 = vmatprep.subr.mxu0 0.0
    %180 = vmatpush1.msra.mxu0 0.0
    %181 = vmatprep.subr.mxu0 0.0
    %182 = vmatpush1.msra.mxu0 0.0
    %183 = vmatprep.subr.mxu0 0.0
    %184 = vmatpush1.msra.mxu0 0.0
    %185 = vmatprep.subr.mxu0 0.0
    %186 = vmatpush1.msra.mxu0 0.0
    %187 = vmatprep.subr.mxu0 0.0
    %188 = vmatpush1.msra.mxu0 0.0
    %189 = vmatprep.subr.mxu0 0.0
    %190 = vmatpush1.msra.mxu0 0.0
    %191 = vmatprep.subr.mxu0 0.0
    %192 = vmatpush1.msra.mxu0 0.0
    %193 = vmatprep.subr.mxu0 0.0
    %194 = vmatpush1.msra.mxu0 0.0
    %195 = vmatprep.subr.mxu0 0.0
    %196 = vmatpush1.msra.mxu0 0.0
    %197 = vmatprep.subr.mxu0 0.0
    %198 = vmatpush1.msra.mxu0 0.0
    %199 = vmatprep.subr.mxu0 0.0
    %200 = vmatpush1.msra.mxu0 0.0
    %201 = vmatprep.subr.mxu0 0.0
    %202 = vmatpush1.msra.mxu0 0.0
    %203 = vmatprep.subr.mxu0 0.0
    %204 = vmatpush1.msra.mxu0 0.0
    %205 = vmatprep.subr.mxu0 0.0
    %206 = vmatpush1.msra.mxu0 0.0
    %207 = vmatprep.subr.mxu0 0.0
    %208 = vmatpush1.msra.mxu0 0.0
    %209 = vmatprep.subr.mxu0 0.0
    %210 = vmatpush1.msra.mxu0 0.0
    %211 = vmatprep.subr.mxu0 0.0
    %212 = vmatpush1.msra.mxu0 0.0
    %213 = vmatprep.subr.mxu0 0.0
    %214 = vmatpush1.msra.mxu0 0.0
    %215 = vmatprep.subr.mxu0 0.0
    %216 = vmatpush1.msra.mxu0 0.0
    %217 = vmatprep.subr.mxu0 0.0
    %218 = vmatpush1.msra.mxu0 0.0
    %219 = vmatprep.subr.mxu0 0.0
    %220 = vmatpush1.msra.mxu0 0.0
    %221 = vmatprep.subr.mxu0 0.0
    %222 = vmatpush1.msra.mxu0 0.0
    %223 = vmatprep.subr.mxu0 0.0
    %224 = vmatpush1.msra.mxu0 0.0
    %225 = vmatprep.subr.mxu0 0.0
    %226 = vmatpush1.msra.mxu0 0.0
    %227 = vmatprep.subr.mxu0 0.0
    %228 = vmatpush1.msra.mxu0 0.0
    %229 = vmatprep.subr.mxu0 0.0
    %230 = vmatpush1.msra.mxu0 0.0
    %231 = vmatprep.subr.mxu0 0.0
    %232 = vmatpush1.msra.mxu0 0.0
    %233 = vmatprep.subr.mxu0 0.0
    %234 = vmatpush1.msra.mxu0 0.0
    %235 = vmatprep.subr.mxu0 0.0
    %236 = vmatpush1.msra.mxu0 0.0
    %237 = vmatprep.mubr.f32.mxu0 0.0
    %238 = vmatmul.mubr.f32.gmra.mrb[0].mxu0 %v162
    %v239 = vpop.f32.mrb[0].mxu0
    %v240 = vadd.f32 %v139, %v239
    %v241 = vpop.f32.mrb[0].mxu0
    %v242 = vadd.f32 %v141, %v241
    %243 = vmatprep.mubr.f32.mxu0 0.0
    %244 = vmatmul.mubr.f32.gmra.mrb[0].mxu0 %v165
    %v245 = vpop.f32.mrb[0].mxu0
    %v246 = vadd.f32 %v145, %v245
    %v247 = vpop.f32.mrb[0].mxu0
    %v248 = vadd.f32 %v147, %v247
    %249 = vmatprep.mubr.f32.mxu0 0.0
    %250 = vmatmul.mubr.f32.gmra.mrb[0].mxu0 %v168
    %v251 = vpop.f32.mrb[0].mxu0
    %v252 = vadd.f32 %v151, %v251
    %v253 = vpop.f32.mrb[0].mxu0
    %v254 = vadd.f32 %v153, %v253
    %255 = vmatprep.mubr.f32.mxu0 0.0
    %256 = vmatmul.mubr.f32.gmra.mrb[0].mxu0 %v171
    %v257 = vpop.f32.mrb[0].mxu0
    %v258 = vadd.f32 %v157, %v257
    %v259 = vpop.f32.mrb[0].mxu0
    %v260 = vadd.f32 %v159, %v259
    %261 = vdwg.mxu0
    %s262 = scalar_lea.vmem %s2, 64
    %v263 = vld [vmem:[%s262] sm:$0xff]
    %v264 = vld [vmem:[%s262 + $0x8] sm:$0xff]
    %v265 = vld [vmem:[%s262 + $0x10] sm:$0xff]
    %v266 = vld [vmem:[%s262 + $0x18] sm:$0xff]
    %267 = vrot.lane.b32.xlu0 %v38, 126
    %v268 = vpop.permute.xlu0 %267
    %269 = vrot.lane.b32.xlu0 %v39, 126
    %v270 = vpop.permute.xlu0 %269
    %vm271 = vcmask 1031168
    %v272 = vsel %vm271, %v268, %v270
    %v276 = vsel %vm59, %v263, 0
    %v279 = vsel %vm59, %v264, 0
    %v282 = vsel %vm59, %v265, 0
    %v285 = vsel %vm59, %v266, 0
    %287 = vmatprep.subr.mxu0 %v270
    %288 = vmatpush1.msra.mxu0 %v272
    %289 = vmatprep.subr.mxu0 0.0
    %290 = vmatpush1.msra.mxu0 0.0
    %291 = vmatprep.subr.mxu0 0.0
    %292 = vmatpush1.msra.mxu0 0.0
    %293 = vmatprep.subr.mxu0 0.0
    %294 = vmatpush1.msra.mxu0 0.0
    %295 = vmatprep.subr.mxu0 0.0
    %296 = vmatpush1.msra.mxu0 0.0
    %297 = vmatprep.subr.mxu0 0.0
    %298 = vmatpush1.msra.mxu0 0.0
    %299 = vmatprep.subr.mxu0 0.0
    %300 = vmatpush1.msra.mxu0 0.0
    %301 = vmatprep.subr.mxu0 0.0
    %302 = vmatpush1.msra.mxu0 0.0
    %303 = vmatprep.subr.mxu0 0.0
    %304 = vmatpush1.msra.mxu0 0.0
    %305 = vmatprep.subr.mxu0 0.0
    %306 = vmatpush1.msra.mxu0 0.0
    %307 = vmatprep.subr.mxu0 0.0
    %308 = vmatpush1.msra.mxu0 0.0
    %309 = vmatprep.subr.mxu0 0.0
    %310 = vmatpush1.msra.mxu0 0.0
    %311 = vmatprep.subr.mxu0 0.0
    %312 = vmatpush1.msra.mxu0 0.0
    %313 = vmatprep.subr.mxu0 0.0
    %314 = vmatpush1.msra.mxu0 0.0
    %315 = vmatprep.subr.mxu0 0.0
    %316 = vmatpush1.msra.mxu0 0.0
    %317 = vmatprep.subr.mxu0 0.0
    %318 = vmatpush1.msra.mxu0 0.0
    %319 = vmatprep.subr.mxu0 0.0
    %320 = vmatpush1.msra.mxu0 0.0
    %321 = vmatprep.subr.mxu0 0.0
    %322 = vmatpush1.msra.mxu0 0.0
    %323 = vmatprep.subr.mxu0 0.0
    %324 = vmatpush1.msra.mxu0 0.0
    %325 = vmatprep.subr.mxu0 0.0
    %326 = vmatpush1.msra.mxu0 0.0
    %327 = vmatprep.subr.mxu0 0.0
    %328 = vmatpush1.msra.mxu0 0.0
    %329 = vmatprep.subr.mxu0 0.0
    %330 = vmatpush1.msra.mxu0 0.0
    %331 = vmatprep.subr.mxu0 0.0
    %332 = vmatpush1.msra.mxu0 0.0
    %333 = vmatprep.subr.mxu0 0.0
    %334 = vmatpush1.msra.mxu0 0.0
    %335 = vmatprep.subr.mxu0 0.0
    %336 = vmatpush1.msra.mxu0 0.0
    %337 = vmatprep.subr.mxu0 0.0
    %338 = vmatpush1.msra.mxu0 0.0
    %339 = vmatprep.subr.mxu0 0.0
    %340 = vmatpush1.msra.mxu0 0.0
    %341 = vmatprep.subr.mxu0 0.0
    %342 = vmatpush1.msra.mxu0 0.0
    %343 = vmatprep.subr.mxu0 0.0
    %344 = vmatpush1.msra.mxu0 0.0
    %345 = vmatprep.subr.mxu0 0.0
    %346 = vmatpush1.msra.mxu0 0.0
    %347 = vmatprep.subr.mxu0 0.0
    %348 = vmatpush1.msra.mxu0 0.0
    %349 = vmatprep.subr.mxu0 0.0
    %350 = vmatpush1.msra.mxu0 0.0
    %351 = vmatprep.mubr.f32.mxu0 0.0
    %352 = vmatmul.mubr.f32.gmra.mrb[0].mxu0 %v276
    %v353 = vpop.f32.mrb[0].mxu0
    %v354 = vadd.f32 0.0, %v353
    %v355 = vpop.f32.mrb[0].mxu0
    %v356 = vadd.f32 0.0, %v355
    %357 = vmatprep.mubr.f32.mxu0 0.0
    %358 = vmatmul.mubr.f32.gmra.mrb[0].mxu0 %v279
    %v359 = vpop.f32.mrb[0].mxu0
    %v360 = vadd.f32 0.0, %v359
    %v361 = vpop.f32.mrb[0].mxu0
    %v362 = vadd.f32 0.0, %v361
    %363 = vmatprep.mubr.f32.mxu0 0.0
    %364 = vmatmul.mubr.f32.gmra.mrb[0].mxu0 %v282
    %v365 = vpop.f32.mrb[0].mxu0
    %v366 = vadd.f32 0.0, %v365
    %v367 = vpop.f32.mrb[0].mxu0
    %v368 = vadd.f32 0.0, %v367
    %369 = vmatprep.mubr.f32.mxu0 0.0
    %370 = vmatmul.mubr.f32.gmra.mrb[0].mxu0 %v285
    %v371 = vpop.f32.mrb[0].mxu0
    %v372 = vadd.f32 0.0, %v371
    %v373 = vpop.f32.mrb[0].mxu0
    %v374 = vadd.f32 0.0, %v373
    %375 = vdwg.mxu0
    %v376 = vadd.f32 %v240, %v354
    %v377 = vadd.f32 %v242, %v356
    %v378 = vadd.f32 %v246, %v360
    %v379 = vadd.f32 %v248, %v362
    %v380 = vadd.f32 %v252, %v366
    %v381 = vadd.f32 %v254, %v368
    %v382 = vadd.f32 %v258, %v372
    %v383 = vadd.f32 %v260, %v374
    %v384 = vld [vmem:[%s3] sm:$0xff]
    %v385 = vld [vmem:[%s3 + $0x8] sm:$0xff]
    %v386 = vld [vmem:[%s3 + $0x10] sm:$0xff]
    %v387 = vld [vmem:[%s3 + $0x18] sm:$0xff]
    %389 = vset.pattern.permute.xlu0 0
    %390 = vperm.xlu0 %389, %v384
    %v391 = vpop.permute.xlu0 %390
    %394 = vset.pattern.permute.xlu0 0
    %395 = vperm.xlu0 %394, %v385
    %v396 = vpop.permute.xlu0 %395
    %399 = vset.pattern.permute.xlu0 0
    %400 = vperm.xlu0 %399, %v386
    %v401 = vpop.permute.xlu0 %400
    %404 = vset.pattern.permute.xlu0 0
    %405 = vperm.xlu0 %404, %v387
    %v406 = vpop.permute.xlu0 %405
    %v408 = vadd.f32 %v376, %v391
    %v409 = vadd.f32 %v377, %v391
    %v410 = vadd.f32 %v378, %v396
    %v411 = vadd.f32 %v379, %v396
    %v412 = vadd.f32 %v380, %v401
    %v413 = vadd.f32 %v381, %v401
    %v414 = vadd.f32 %v382, %v406
    %v415 = vadd.f32 %v383, %v406
    %v416 = vmul.f32 %v408, 1.702
    %v417 = vmul.f32 %v409, 1.702
    %v418 = vmul.f32 %v410, 1.702
    %v419 = vmul.f32 %v411, 1.702
    %v420 = vmul.f32 %v412, 1.702
    %v421 = vmul.f32 %v413, 1.702
    %v422 = vmul.f32 %v414, 1.702
    %v423 = vmul.f32 %v415, 1.702
    %v424 = vxor.u32 %v416, 2147483648
    %v425 = vxor.u32 %v417, 2147483648
    %v426 = vxor.u32 %v418, 2147483648
    %v427 = vxor.u32 %v419, 2147483648
    %v428 = vxor.u32 %v420, 2147483648
    %v429 = vxor.u32 %v421, 2147483648
    %v430 = vxor.u32 %v422, 2147483648
    %v431 = vxor.u32 %v423, 2147483648
    %v432 = vmul.f32 %v424, 1.442695
    %v433 = vpow.pop %v432
    %v434 = vmul.f32 %v425, 1.442695
    %v435 = vpow.pop %v434
    %v436 = vmul.f32 %v426, 1.442695
    %v437 = vpow.pop %v436
    %v438 = vmul.f32 %v427, 1.442695
    %v439 = vpow.pop %v438
    %v440 = vmul.f32 %v428, 1.442695
    %v441 = vpow.pop %v440
    %v442 = vmul.f32 %v429, 1.442695
    %v443 = vpow.pop %v442
    %v444 = vmul.f32 %v430, 1.442695
    %v445 = vpow.pop %v444
    %v446 = vmul.f32 %v431, 1.442695
    %v447 = vpow.pop %v446
    %v448 = vadd.f32 %v433, 1.0
    %v449 = vadd.f32 %v435, 1.0
    %v450 = vadd.f32 %v437, 1.0
    %v451 = vadd.f32 %v439, 1.0
    %v452 = vadd.f32 %v441, 1.0
    %v453 = vadd.f32 %v443, 1.0
    %v454 = vadd.f32 %v445, 1.0
    %v455 = vadd.f32 %v447, 1.0
    %v456 = vrcp.pop %v448
    %v457 = vmul.f32 1.0, %v456
    %v458 = vrcp.pop %v449
    %v459 = vmul.f32 1.0, %v458
    %v460 = vrcp.pop %v450
    %v461 = vmul.f32 1.0, %v460
    %v462 = vrcp.pop %v451
    %v463 = vmul.f32 1.0, %v462
    %v464 = vrcp.pop %v452
    %v465 = vmul.f32 1.0, %v464
    %v466 = vrcp.pop %v453
    %v467 = vmul.f32 1.0, %v466
    %v468 = vrcp.pop %v454
    %v469 = vmul.f32 1.0, %v468
    %v470 = vrcp.pop %v455
    %v471 = vmul.f32 1.0, %v470
    %v472 = vmul.f32 %v408, %v457
    %v473 = vmul.f32 %v409, %v459
    %v474 = vmul.f32 %v410, %v461
    %v475 = vmul.f32 %v411, %v463
    %v476 = vmul.f32 %v412, %v465
    %v477 = vmul.f32 %v413, %v467
    %v478 = vmul.f32 %v414, %v469
    %v479 = vmul.f32 %v415, %v471
    %480 = vrot.lane.b32.xlu0 %v31, 127
    %v481 = vpop.permute.xlu0 %480
    %482 = vrot.lane.b32.xlu0 %v35, 127
    %v483 = vpop.permute.xlu0 %482
    %v484 = vsel %vm55, %v481, %v483
    %v487 = vmul.f32 %v472, %v484
    %v488 = vmul.f32 %v473, %v483
    %v489 = vmul.f32 %v474, %v484
    %v490 = vmul.f32 %v475, %v483
    %v491 = vmul.f32 %v476, %v484
    %v492 = vmul.f32 %v477, %v483
    %v493 = vmul.f32 %v478, %v484
    %v494 = vmul.f32 %v479, %v483
    %v495 = vld [vmem:[%s4] sm:$0xf]
    %s496 = scalar_lea.vmem %s4, 4
    %v497 = vld [vmem:[%s496] sm:$0xf]
    %506 = vrot.lane.b32.xlu0 %v487, 127
    %v507 = vpop.permute.xlu0 %506
    %508 = vrot.lane.b32.xlu0 %v488, 127
    %v509 = vpop.permute.xlu0 %508
    %510 = vrot.lane.b32.xlu0 %v489, 127
    %v511 = vpop.permute.xlu0 %510
    %512 = vrot.lane.b32.xlu0 %v490, 127
    %v513 = vpop.permute.xlu0 %512
    %514 = vrot.lane.b32.xlu0 %v491, 127
    %v515 = vpop.permute.xlu0 %514
    %516 = vrot.lane.b32.xlu0 %v492, 127
    %v517 = vpop.permute.xlu0 %516
    %518 = vrot.lane.b32.xlu0 %v493, 127
    %v519 = vpop.permute.xlu0 %518
    %520 = vrot.lane.b32.xlu0 %v494, 127
    %v521 = vpop.permute.xlu0 %520
    %v522 = vsel %vm55, %v507, %v509
    %v523 = vsel %vm55, %v511, %v513
    %v524 = vsel %vm55, %v515, %v517
    %v525 = vsel %vm55, %v519, %v521
    %vm530 = vcmask 261120
    %v532 = vsel %vm530, %v497, 0
    %534 = vmatprep.subr.mxu0 0.0
    %535 = vmatpush1.msra.mxu0 %v522
    %536 = vmatprep.subr.mxu0 0.0
    %537 = vmatpush1.msra.mxu0 %v523
    %538 = vmatprep.subr.mxu0 0.0
    %539 = vmatpush1.msra.mxu0 %v524
    %540 = vmatprep.subr.mxu0 0.0
    %541 = vmatpush1.msra.mxu0 %v525
    %542 = vmatprep.subr.mxu0 0.0
    %543 = vmatpush1.msra.mxu0 0.0
    %544 = vmatprep.subr.mxu0 0.0
    %545 = vmatpush1.msra.mxu0 0.0
    %546 = vmatprep.subr.mxu0 0.0
    %547 = vmatpush1.msra.mxu0 0.0
    %548 = vmatprep.subr.mxu0 0.0
    %549 = vmatpush1.msra.mxu0 0.0
    %550 = vmatprep.subr.mxu0 0.0
    %551 = vmatpush1.msra.mxu0 0.0
    %552 = vmatprep.subr.mxu0 0.0
    %553 = vmatpush1.msra.mxu0 0.0
    %554 = vmatprep.subr.mxu0 0.0
    %555 = vmatpush1.msra.mxu0 0.0
    %556 = vmatprep.subr.mxu0 0.0
    %557 = vmatpush1.msra.mxu0 0.0
    %558 = vmatprep.subr.mxu0 0.0
    %559 = vmatpush1.msra.mxu0 0.0
    %560 = vmatprep.subr.mxu0 0.0
    %561 = vmatpush1.msra.mxu0 0.0
    %562 = vmatprep.subr.mxu0 0.0
    %563 = vmatpush1.msra.mxu0 0.0
    %564 = vmatprep.subr.mxu0 0.0
    %565 = vmatpush1.msra.mxu0 0.0
    %566 = vmatprep.subr.mxu0 0.0
    %567 = vmatpush1.msra.mxu0 0.0
    %568 = vmatprep.subr.mxu0 0.0
    %569 = vmatpush1.msra.mxu0 0.0
    %570 = vmatprep.subr.mxu0 0.0
    %571 = vmatpush1.msra.mxu0 0.0
    %572 = vmatprep.subr.mxu0 0.0
    %573 = vmatpush1.msra.mxu0 0.0
    %574 = vmatprep.subr.mxu0 0.0
    %575 = vmatpush1.msra.mxu0 0.0
    %576 = vmatprep.subr.mxu0 0.0
    %577 = vmatpush1.msra.mxu0 0.0
    %578 = vmatprep.subr.mxu0 0.0
    %579 = vmatpush1.msra.mxu0 0.0
    %580 = vmatprep.subr.mxu0 0.0
    %581 = vmatpush1.msra.mxu0 0.0
    %582 = vmatprep.subr.mxu0 0.0
    %583 = vmatpush1.msra.mxu0 0.0
    %584 = vmatprep.subr.mxu0 0.0
    %585 = vmatpush1.msra.mxu0 0.0
    %586 = vmatprep.subr.mxu0 0.0
    %587 = vmatpush1.msra.mxu0 0.0
    %588 = vmatprep.subr.mxu0 0.0
    %589 = vmatpush1.msra.mxu0 0.0
    %590 = vmatprep.subr.mxu0 0.0
    %591 = vmatpush1.msra.mxu0 0.0
    %592 = vmatprep.subr.mxu0 0.0
    %593 = vmatpush1.msra.mxu0 0.0
    %594 = vmatprep.subr.mxu0 0.0
    %595 = vmatpush1.msra.mxu0 0.0
    %596 = vmatprep.subr.mxu0 0.0
    %597 = vmatpush1.msra.mxu0 0.0
    %598 = vmatprep.mubr.f32.mxu0 0.0
    %599 = vmatmul.mubr.f32.gmra.mrb[0].mxu0 %v532
    %v600 = vpop.f32.mrb[0].mxu0
    %v601 = vadd.f32 0.0, %v600
    %v602 = vpop.f32.mrb[0].mxu0
    %603 = vdwg.mxu0
    %v605 = vsel %vm530, %v495, 0
    %607 = vmatprep.subr.mxu0 0.0
    %608 = vmatpush1.msra.mxu0 %v487
    %609 = vmatprep.subr.mxu0 0.0
    %610 = vmatpush1.msra.mxu0 %v489
    %611 = vmatprep.subr.mxu0 0.0
    %612 = vmatpush1.msra.mxu0 %v491
    %613 = vmatprep.subr.mxu0 0.0
    %614 = vmatpush1.msra.mxu0 %v493
    %615 = vmatprep.subr.mxu0 0.0
    %616 = vmatpush1.msra.mxu0 0.0
    %617 = vmatprep.subr.mxu0 0.0
    %618 = vmatpush1.msra.mxu0 0.0
    %619 = vmatprep.subr.mxu0 0.0
    %620 = vmatpush1.msra.mxu0 0.0
    %621 = vmatprep.subr.mxu0 0.0
    %622 = vmatpush1.msra.mxu0 0.0
    %623 = vmatprep.subr.mxu0 0.0
    %624 = vmatpush1.msra.mxu0 0.0
    %625 = vmatprep.subr.mxu0 0.0
    %626 = vmatpush1.msra.mxu0 0.0
    %627 = vmatprep.subr.mxu0 0.0
    %628 = vmatpush1.msra.mxu0 0.0
    %629 = vmatprep.subr.mxu0 0.0
    %630 = vmatpush1.msra.mxu0 0.0
    %631 = vmatprep.subr.mxu0 0.0
    %632 = vmatpush1.msra.mxu0 0.0
    %633 = vmatprep.subr.mxu0 0.0
    %634 = vmatpush1.msra.mxu0 0.0
    %635 = vmatprep.subr.mxu0 0.0
    %636 = vmatpush1.msra.mxu0 0.0
    %637 = vmatprep.subr.mxu0 0.0
    %638 = vmatpush1.msra.mxu0 0.0
    %639 = vmatprep.subr.mxu0 0.0
    %640 = vmatpush1.msra.mxu0 0.0
    %641 = vmatprep.subr.mxu0 0.0
    %642 = vmatpush1.msra.mxu0 0.0
    %643 = vmatprep.subr.mxu0 0.0
    %644 = vmatpush1.msra.mxu0 0.0
    %645 = vmatprep.subr.mxu0 0.0
    %646 = vmatpush1.msra.mxu0 0.0
    %647 = vmatprep.subr.mxu0 0.0
    %648 = vmatpush1.msra.mxu0 0.0
    %649 = vmatprep.subr.mxu0 0.0
    %650 = vmatpush1.msra.mxu0 0.0
    %651 = vmatprep.subr.mxu0 0.0
    %652 = vmatpush1.msra.mxu0 0.0
    %653 = vmatprep.subr.mxu0 0.0
    %654 = vmatpush1.msra.mxu0 0.0
    %655 = vmatprep.subr.mxu0 0.0
    %656 = vmatpush1.msra.mxu0 0.0
    %657 = vmatprep.subr.mxu0 0.0
    %658 = vmatpush1.msra.mxu0 0.0
    %659 = vmatprep.subr.mxu0 0.0
    %660 = vmatpush1.msra.mxu0 0.0
    %661 = vmatprep.subr.mxu0 0.0
    %662 = vmatpush1.msra.mxu0 0.0
    %663 = vmatprep.subr.mxu0 0.0
    %664 = vmatpush1.msra.mxu0 0.0
    %665 = vmatprep.subr.mxu0 0.0
    %666 = vmatpush1.msra.mxu0 0.0
    %667 = vmatprep.subr.mxu0 0.0
    %668 = vmatpush1.msra.mxu0 0.0
    %669 = vmatprep.subr.mxu0 0.0
    %670 = vmatpush1.msra.mxu0 0.0
    %671 = vmatprep.mubr.f32.mxu0 0.0
    %672 = vmatmul.mubr.f32.gmra.mrb[0].mxu0 %v605
    %v673 = vpop.f32.mrb[0].mxu0
    %v674 = vadd.f32 %v601, %v673
    %v675 = vpop.f32.mrb[0].mxu0
    %676 = vdwg.mxu0
    %s677 = scalar_lea.vmem %s4, 8
    %v678 = vld [vmem:[%s677] sm:$0xf]
    %679 = vrot.lane.b32.xlu0 %v487, 126
    %v680 = vpop.permute.xlu0 %679
    %681 = vrot.lane.b32.xlu0 %v488, 126
    %v682 = vpop.permute.xlu0 %681
    %683 = vrot.lane.b32.xlu0 %v489, 126
    %v684 = vpop.permute.xlu0 %683
    %685 = vrot.lane.b32.xlu0 %v490, 126
    %v686 = vpop.permute.xlu0 %685
    %687 = vrot.lane.b32.xlu0 %v491, 126
    %v688 = vpop.permute.xlu0 %687
    %689 = vrot.lane.b32.xlu0 %v492, 126
    %v690 = vpop.permute.xlu0 %689
    %691 = vrot.lane.b32.xlu0 %v493, 126
    %v692 = vpop.permute.xlu0 %691
    %693 = vrot.lane.b32.xlu0 %v494, 126
    %v694 = vpop.permute.xlu0 %693
    %v695 = vsel %vm271, %v680, %v682
    %v696 = vsel %vm271, %v684, %v686
    %v697 = vsel %vm271, %v688, %v690
    %v698 = vsel %vm271, %v692, %v694
    %v704 = vsel %vm530, %v678, 0
    %706 = vmatprep.subr.mxu0 0.0
    %707 = vmatpush1.msra.mxu0 %v695
    %708 = vmatprep.subr.mxu0 0.0
    %709 = vmatpush1.msra.mxu0 %v696
    %710 = vmatprep.subr.mxu0 0.0
    %711 = vmatpush1.msra.mxu0 %v697
    %712 = vmatprep.subr.mxu0 0.0
    %713 = vmatpush1.msra.mxu0 %v698
    %714 = vmatprep.subr.mxu0 0.0
    %715 = vmatpush1.msra.mxu0 0.0
    %716 = vmatprep.subr.mxu0 0.0
    %717 = vmatpush1.msra.mxu0 0.0
    %718 = vmatprep.subr.mxu0 0.0
    %719 = vmatpush1.msra.mxu0 0.0
    %720 = vmatprep.subr.mxu0 0.0
    %721 = vmatpush1.msra.mxu0 0.0
    %722 = vmatprep.subr.mxu0 0.0
    %723 = vmatpush1.msra.mxu0 0.0
    %724 = vmatprep.subr.mxu0 0.0
    %725 = vmatpush1.msra.mxu0 0.0
    %726 = vmatprep.subr.mxu0 0.0
    %727 = vmatpush1.msra.mxu0 0.0
    %728 = vmatprep.subr.mxu0 0.0
    %729 = vmatpush1.msra.mxu0 0.0
    %730 = vmatprep.subr.mxu0 0.0
    %731 = vmatpush1.msra.mxu0 0.0
    %732 = vmatprep.subr.mxu0 0.0
    %733 = vmatpush1.msra.mxu0 0.0
    %734 = vmatprep.subr.mxu0 0.0
    %735 = vmatpush1.msra.mxu0 0.0
    %736 = vmatprep.subr.mxu0 0.0
    %737 = vmatpush1.msra.mxu0 0.0
    %738 = vmatprep.subr.mxu0 0.0
    %739 = vmatpush1.msra.mxu0 0.0
    %740 = vmatprep.subr.mxu0 0.0
    %741 = vmatpush1.msra.mxu0 0.0
    %742 = vmatprep.subr.mxu0 0.0
    %743 = vmatpush1.msra.mxu0 0.0
    %744 = vmatprep.subr.mxu0 0.0
    %745 = vmatpush1.msra.mxu0 0.0
    %746 = vmatprep.subr.mxu0 0.0
    %747 = vmatpush1.msra.mxu0 0.0
    %748 = vmatprep.subr.mxu0 0.0
    %749 = vmatpush1.msra.mxu0 0.0
    %750 = vmatprep.subr.mxu0 0.0
    %751 = vmatpush1.msra.mxu0 0.0
    %752 = vmatprep.subr.mxu0 0.0
    %753 = vmatpush1.msra.mxu0 0.0
    %754 = vmatprep.subr.mxu0 0.0
    %755 = vmatpush1.msra.mxu0 0.0
    %756 = vmatprep.subr.mxu0 0.0
    %757 = vmatpush1.msra.mxu0 0.0
    %758 = vmatprep.subr.mxu0 0.0
    %759 = vmatpush1.msra.mxu0 0.0
    %760 = vmatprep.subr.mxu0 0.0
    %761 = vmatpush1.msra.mxu0 0.0
    %762 = vmatprep.subr.mxu0 0.0
    %763 = vmatpush1.msra.mxu0 0.0
    %764 = vmatprep.subr.mxu0 0.0
    %765 = vmatpush1.msra.mxu0 0.0
    %766 = vmatprep.subr.mxu0 0.0
    %767 = vmatpush1.msra.mxu0 0.0
    %768 = vmatprep.subr.mxu0 0.0
    %769 = vmatpush1.msra.mxu0 0.0
    %770 = vmatprep.mubr.f32.mxu0 0.0
    %771 = vmatmul.mubr.f32.gmra.mrb[0].mxu0 %v704
    %v772 = vpop.f32.mrb[0].mxu0
    %v773 = vadd.f32 0.0, %v772
    %v774 = vpop.f32.mrb[0].mxu0
    %775 = vdwg.mxu0
    %v776 = vadd.f32 %v674, %v773
    %v777 = vld [vmem:[%s5] sm:$0xf]
    %779 = vset.pattern.permute.xlu0 0
    %780 = vperm.xlu0 %779, %v777
    %v781 = vpop.permute.xlu0 %780
    %v783 = vadd.f32 %v776, %v781
    %784 = vst [vmem:[#allocation2] sm:$0xf] %v783
    // Predicated region
    $region26: #{tpu_custom_call.1} parent=1 // pred_check
      _
    $region27: #{tpu_custom_call.1} parent=1 // pred_check_branch
      %786 = sbr.rel (0) target = $region29
    $region28: #{tpu_custom_call.1} parent=1 // pred_region
      %s788 = ssub.s32 64, 64
      %789 = vsyncadd [#allocation3], %s788
      %s791 = sshll.u32 [#allocation2], 4
      %s792 = int_to_ptr.vmem [resolvable:$true] %s791
      %794 = dma.vmem_to_hbm [thread:$0]  %s792, 64, %s6, [#allocation3]
    $region29: #{tpu_custom_call.1} parent=1 // pred_fallthru
      _
    // Predicated region
    $region30: #{tpu_custom_call.1} parent=1 // pred_check
      _
    $region31: #{tpu_custom_call.1} parent=1 // pred_check_branch
      %796 = sbr.rel (0) target = $region33
    $region32: #{tpu_custom_call.1} parent=1 // pred_region
      %797 = dma.done [#allocation3], 64
    $region33: #{tpu_custom_call.1} parent=1 // pred_fallthru
      _
    %798 = vsyncpa [#allocation3], 1

</llo_original>
